<compile_context>
chip_gen: v6e
topology: v6e:2x2x1
jax: 0.10.0
libtpu: 0.0.40
codegen_flags: <defaults>
</compile_context>

<pallas_src>
import jax
import jax.numpy as jnp
from jax.experimental import pallas as pl
from jax.experimental.pallas import tpu as pltpu

LANES = 128
UNIT = 8                       # f32 sublane granularity (one vreg = 8 x 128)
MAX_ROW_TILE = 4096            # 4096 x 128 x f32 = 2 MiB per input block
VMEM_LIMIT_BYTES = 32 * 1024 * 1024


def _num_shards_for_device():
    """2 shards on dual-TensorCore chips (v7x); 1 on single-TC v5e/v6e."""
    # TODO(synk): verify with an xprof trace on v7x that the "parallel" leading
    # grid axis actually lands on both TensorCores; otherwise fall back to an
    # explicit pl.core_map / pltpu.create_tensorcore_mesh split.
    try:
        kind = jax.devices()[0].device_kind.lower()
    except Exception:
        return 1
    return 2 if "v7" in kind else 1


def _make_kernel(rows_valid, row_tile, blocks_per_shard, needed_blocks,
                 weighted, needs_mask):
    """Build the reduction kernel body (static variants via Python flags)."""
    fold = (row_tile % UNIT == 0)
    groups = row_tile // UNIT if fold else 1

    def tile_prod(s_ref, t_ref, w_ref):
        # Negation is deferred to the epilogue (one scalar negate per shard).
        s = s_ref[...].astype(jnp.float32)
        t = t_ref[...].astype(jnp.float32)
        p = t * jnp.log(s)
        if weighted:
            p = w_ref[...].astype(jnp.float32) * p
        return p

    def kernel(*refs):
        if weighted:
            s_ref, t_ref, w_ref, o_ref, acc_ref = refs
        else:
            s_ref, t_ref, o_ref, acc_ref = refs
            w_ref = None

        sh = pl.program_id(0)          # shard (parallel axis)
        j = pl.program_id(1)           # block within shard (reduction axis)

        @pl.when(j == 0)
        def _():
            acc_ref[...] = jnp.zeros_like(acc_ref)

        def fold_add(p):
            if fold:
                # Tree of whole-vreg VALU adds into a single-vreg accumulator.
                acc_ref[...] += p.reshape(groups, UNIT, LANES).sum(axis=0)
            else:
                acc_ref[...] += p

        if needs_mask:
            blk = sh * blocks_per_shard + j          # unclamped global block id
            last = needed_blocks - 1

            @pl.when(blk < last)
            def _():  # interior blocks: unmasked fast path
                fold_add(tile_prod(s_ref, t_ref, w_ref))

            @pl.when(blk >= last)
            def _():  # partial last block and (theoretical) clamped dummies
                p = tile_prod(s_ref, t_ref, w_ref)
                row_idx = blk * row_tile + jax.lax.broadcasted_iota(
                    jnp.int32, (row_tile, LANES), 0)
                # Single post-product select: out-of-range rows contribute
                # exactly 0 (any NaN/Inf from log of garbage is discarded).
                fold_add(jnp.where(row_idx < rows_valid, p, jnp.float32(0.0)))
        else:
            fold_add(tile_prod(s_ref, t_ref, w_ref))

        @pl.when(j == pl.num_programs(1) - 1)
        def _():
            # One cross-lane/sublane reduce + one negation per shard.
            o_ref[0, 0] = -jnp.sum(acc_ref[...])

    return kernel


def _slab_loss(s2, t2, w2, rows):
    """Reduce (rows, 128) slabs with the Pallas kernel -> scalar float32."""
    weighted = w2 is not None

    rows_units = pl.cdiv(rows, UNIT)
    shards = max(1, min(_num_shards_for_device(), rows_units))
    max_tile_units = MAX_ROW_TILE // UNIT
    units_per_shard = pl.cdiv(rows_units, shards)
    blocks_per_shard = pl.cdiv(units_per_shard, max_tile_units)
    num_blocks = shards * blocks_per_shard

    if num_blocks == 1:
        row_tile = rows                          # full-extent block, always legal
    else:
        row_tile = pl.cdiv(rows_units, num_blocks) * UNIT

    needed_blocks = pl.cdiv(rows, row_tile)      # blocks that hold real data
    needs_mask = (rows % row_tile != 0) or (num_blocks > needed_blocks)

    if num_blocks > needed_blocks:
        # Safety net only: the tiling above gives every shard real blocks for
        # all practical sizes; any clamped dummy step is fully masked to 0.
        def in_index(sh, j):
            return (jnp.minimum(sh * blocks_per_shard + j, needed_blocks - 1), 0)
    else:
        def in_index(sh, j):
            return (sh * blocks_per_shard + j, 0)

    inputs = [s2, t2] + ([w2] if weighted else [])

    # TODO(synk): add pipeline_mode=pl.Buffered(3) here if an xprof trace on
    # v7x shows exposed DMA gaps after the 2 MiB tile bump.
    in_spec = pl.BlockSpec((row_tile, LANES), in_index)
    out_spec = pl.BlockSpec((1, 1), lambda sh, j: (sh, 0),
                            memory_space=pltpu.SMEM)

    acc_rows = UNIT if row_tile % UNIT == 0 else row_tile
    kernel = _make_kernel(rows, row_tile, blocks_per_shard, needed_blocks,
                          weighted, needs_mask)

    n_total = rows * LANES
    bytes_in = sum(int(a.size) * a.dtype.itemsize for a in inputs)
    cost = pl.CostEstimate(
        flops=(4 if weighted else 3) * n_total,
        transcendentals=n_total,
        bytes_accessed=bytes_in + shards * 4,
    )

    out = pl.pallas_call(
        kernel,
        out_shape=jax.ShapeDtypeStruct((shards, 1), jnp.float32),
        grid_spec=pltpu.PrefetchScalarGridSpec(
            num_scalar_prefetch=0,
            grid=(shards, blocks_per_shard),
            in_specs=[in_spec] * len(inputs),
            out_specs=out_spec,
            scratch_shapes=[pltpu.VMEM((acc_rows, LANES), jnp.float32)],
        ),
        compiler_params=pltpu.CompilerParams(
            dimension_semantics=("parallel", "arbitrary"),
            vmem_limit_bytes=VMEM_LIMIT_BYTES,
        ),
        cost_estimate=cost,
    )(*inputs)

    return jnp.sum(out)


def distil_loss(s_output, t_output, weights=None):
    """Pallas implementation of DistilLoss.forward -> scalar float32."""
    if weights is not None and jnp.shape(weights) != jnp.shape(s_output):
        # TODO(synk): broadcasting materializes a copy; same-shape weights
        # (the common case) pass through untouched.
        weights = jnp.broadcast_to(weights, jnp.shape(s_output))

    s_flat = s_output.reshape(-1)
    t_flat = t_output.reshape(-1)
    w_flat = weights.reshape(-1) if weights is not None else None

    n = s_flat.shape[0]
    main = (n // LANES) * LANES
    tail = n - main

    total = jnp.float32(0.0)
    if tail:
        # <128-element lane remainder handled in plain JAX: avoids the old
        # jnp.pad, which copied every input whenever numel % 128 != 0.
        ts = s_flat[main:].astype(jnp.float32)
        tt = t_flat[main:].astype(jnp.float32)
        tl = tt * jnp.log(ts)
        if w_flat is not None:
            tl = w_flat[main:].astype(jnp.float32) * tl
        total = total - jnp.sum(tl)

    if main:
        rows = main // LANES

        def slab(x):
            return (x if tail == 0 else x[:main]).reshape(rows, LANES)

        w2 = slab(w_flat) if w_flat is not None else None
        total = total + _slab_loss(slab(s_flat), slab(t_flat), w2, rows)

    return total


if __name__ == "__main__":
    key = jax.random.PRNGKey(0)
    k1, k2, k3, k4, k5 = jax.random.split(key, 5)

    B, C, H, W = 2, 4, 16, 16  # NCHW, matching the PyTorch convention

    # s_output must be strictly positive (it goes through log); use softmax-like
    # positive values. t_output is a soft target distribution (positive).
    s_output = jax.nn.softmax(jax.random.normal(k1, (B, C, H, W), jnp.float32), axis=1)
    t_output = jax.nn.softmax(jax.random.normal(k2, (B, C, H, W), jnp.float32), axis=1)
    weights = jax.random.uniform(k3, (B, C, H, W), jnp.float32)

    # Unweighted path (weights=None, the module default)
    loss = distil_loss(s_output, t_output)
    jax.block_until_ready(loss)

    # Weighted path
    loss_w = distil_loss(s_output, t_output, weights)
    jax.block_until_ready(loss_w)

    # Reference check in plain JAX
    ref = jnp.sum(-t_output * jnp.log(s_output))
    ref_w = jnp.sum(weights * (-t_output * jnp.log(s_output)))
    assert jnp.allclose(loss, ref, rtol=1e-5, atol=1e-5), (loss, ref)
    assert jnp.allclose(loss_w, ref_w, rtol=1e-5, atol=1e-5), (loss_w, ref_w)

    # Lane-misaligned shape: exercises the plain-JAX <128-element tail path
    # (no pad copy) plus a tiny full-extent slab block.
    s_m = jax.nn.softmax(jax.random.normal(k4, (3, 45), jnp.float32), axis=1)
    t_m = jax.nn.softmax(jax.random.normal(k5, (3, 45), jnp.float32), axis=1)
    loss_m = distil_loss(s_m, t_m)
    jax.block_until_ready(loss_m)
    ref_m = jnp.sum(-t_m * jnp.log(s_m))
    assert jnp.allclose(loss_m, ref_m, rtol=1e-5, atol=1e-5), (loss_m, ref_m)

    print("KERNEL_OK")
</pallas_src>

<mosaic_0001>
module attributes {stable_mosaic.version = 11 : i64} {
  func.func @kernel(%arg0: i32, %arg1: i32, %arg2: memref<16x128xf32, #tpu.memory_space<vmem>>, %arg3: memref<16x128xf32, #tpu.memory_space<vmem>>, %arg4: memref<1x1xf32, #tpu.memory_space<smem>>, %arg5: memref<8x128xf32, #tpu.memory_space<vmem>>) attributes {dimension_semantics = [#tpu.dimension_semantics<parallel>, #tpu.dimension_semantics<arbitrary>], iteration_bounds = array<i64: 1, 1>, scalar_prefetch = 0 : i64, scratch_operands = 1 : i64, tpu.core_type = #tpu.core_type<tc>, window_params = [{transform_indices = @transform_0, window_bounds = array<i64: 16, 128>}, {transform_indices = @transform_1, window_bounds = array<i64: 16, 128>}, {transform_indices = @transform_2, window_bounds = array<i64: 1, 1>}]} {
    %c0_i32 = arith.constant 0 : i32
    %0 = arith.cmpi eq, %arg1, %c0_i32 : i32
    %1 = arith.extui %0 : i1 to i32
    %c0_i32_0 = arith.constant 0 : i32
    %2 = arith.cmpi ne, %1, %c0_i32_0 : i32
    scf.if %2 {
      %cst_10 = arith.constant 0.000000e+00 : f32
      %15 = vector.broadcast %cst_10 : f32 to vector<8x128xf32>
      %c0_11 = arith.constant 0 : index
      %c0_12 = arith.constant 0 : index
      %16 = vector.load %arg5[%c0_11, %c0_12] : memref<8x128xf32, #tpu.memory_space<vmem>>, vector<8x128xf32>
      tpu.vector_store %arg5[%c0_11, %c0_12], %15 {strides = array<i32>} : memref<8x128xf32, #tpu.memory_space<vmem>>, vector<8x128xf32>,
    } else {
    }
    %c0 = arith.constant 0 : index
    %c0_1 = arith.constant 0 : index
    %3 = vector.load %arg2[%c0, %c0_1] : memref<16x128xf32, #tpu.memory_space<vmem>>, vector<16x128xf32>
    %c0_2 = arith.constant 0 : index
    %c0_3 = arith.constant 0 : index
    %4 = vector.load %arg3[%c0_2, %c0_3] : memref<16x128xf32, #tpu.memory_space<vmem>>, vector<16x128xf32>
    %5 = math.log %3 : vector<16x128xf32>
    %6 = arith.mulf %4, %5 : vector<16x128xf32>
    %c0_4 = arith.constant 0 : index
    %c0_5 = arith.constant 0 : index
    %7 = vector.load %arg5[%c0_4, %c0_5] : memref<8x128xf32, #tpu.memory_space<vmem>>, vector<8x128xf32>
    %8 = vector.shape_cast %6 : vector<16x128xf32> to vector<2x8x128xf32>
    %cst = arith.constant dense<0.000000e+00> : vector<8x128xf32>
    %9 = vector.multi_reduction <add>, %8, %cst [0] : vector<2x8x128xf32> to vector<8x128xf32>
    %10 = arith.addf %7, %9 : vector<8x128xf32>
    %c0_6 = arith.constant 0 : index
    %c0_7 = arith.constant 0 : index
    %11 = vector.load %arg5[%c0_6, %c0_7] : memref<8x128xf32, #tpu.memory_space<vmem>>, vector<8x128xf32>
    tpu.vector_store %arg5[%c0_6, %c0_7], %10 {strides = array<i32>} : memref<8x128xf32, #tpu.memory_space<vmem>>, vector<8x128xf32>,
    %c0_i32_8 = arith.constant 0 : i32
    %12 = arith.cmpi eq, %arg1, %c0_i32_8 : i32
    %13 = arith.extui %12 : i1 to i32
    %c0_i32_9 = arith.constant 0 : i32
    %14 = arith.cmpi ne, %13, %c0_i32_9 : i32
    scf.if %14 {
      %c0_10 = arith.constant 0 : index
      %c0_11 = arith.constant 0 : index
      %15 = vector.load %arg5[%c0_10, %c0_11] : memref<8x128xf32, #tpu.memory_space<vmem>>, vector<8x128xf32>
      %16 = vector.shape_cast %15 : vector<8x128xf32> to vector<1x8x128xf32>
      %cst_12 = arith.constant dense<0.000000e+00> : vector<1xf32>
      %17 = vector.multi_reduction <add>, %16, %cst_12 [1, 2] : vector<1x8x128xf32> to vector<1xf32>
      %18 = vector.shape_cast %17 : vector<1xf32> to vector<1x1x1xf32>
      %19 = vector.extract %18[0, 0, 0] : f32 from vector<1x1x1xf32>
      %cst_13 = arith.constant 0.000000e+00 : f32
      %20 = arith.subf %cst_13, %19 : f32
      %c0_14 = arith.constant 0 : index
      %c0_15 = arith.constant 0 : index
      %21 = memref.load %arg4[%c0_14, %c0_15] : memref<1x1xf32, #tpu.memory_space<smem>>
      memref.store %20, %arg4[%c0_14, %c0_15] : memref<1x1xf32, #tpu.memory_space<smem>>
    } else {
    }
    return
  }
  func.func @transform_0(%arg0: i32, %arg1: i32) -> (i32, i32) {
    %c1_i32 = arith.constant 1 : i32
    %0 = arith.muli %arg0, %c1_i32 : i32
    %1 = arith.addi %0, %arg1 : i32
    %c0_i32 = arith.constant 0 : i32
    %c0_i32_0 = arith.constant 0 : i32
    return %1, %c0_i32 : i32, i32
  }
  func.func @transform_1(%arg0: i32, %arg1: i32) -> (i32, i32) {
    %c1_i32 = arith.constant 1 : i32
    %0 = arith.muli %arg0, %c1_i32 : i32
    %1 = arith.addi %0, %arg1 : i32
    %c0_i32 = arith.constant 0 : i32
    %c0_i32_0 = arith.constant 0 : i32
    return %1, %c0_i32 : i32, i32
  }
  func.func @transform_2(%arg0: i32, %arg1: i32) -> (i32, i32) {
    %c0_i32 = arith.constant 0 : i32
    %c0_i32_0 = arith.constant 0 : i32
    return %arg0, %c0_i32 : i32, i32
  }
}

</mosaic_0001>

<llo_original>
// kernel: tpu_custom_call.1
$region0: #{tpu_custom_call.1}
  #allocation0 [shape = 'u32[]', space=smem, size = 0x4, offset = 0x4, fixed_abs, tag = 'smem constant byte address 0x4 - core index']
  #allocation1 [shape = 'u32[144,128]{1,0:T(1,128)}', space=vmem, size = 0x12000, scoped, tag = 'internal scratch']
  #allocation2 [shape = 'f32[8,128]{1,0:T(8,128)}', space=vmem, size = 0x1000, scoped, tag = 'scratch operand']
  %s0 = inlined_call_operand.hbm [shape: f32[16,128], index: 0, kind: input, shape index: {}]
  %s1 = inlined_call_operand.hbm [shape: f32[16,128], index: 1, kind: input, shape index: {}]
  %s2 = inlined_call_operand.hbm [shape: f32[1,1], index: 2, kind: output, shape index: {}]
  %s3 = sld [smem:[#allocation0]]
  $region34: #{tpu_custom_call.1} parent=0
    _
  %s5 = ssub.s32 1, %s3
  %s6 = scalar_select 0, %s5, %s3
  $region1: #{tpu_custom_call.1} parent=0
    #allocation3 [shape = 'u8[8192]{0}', space=vmem, size = 0x2000, scoped, tag = 'input window, operand 0, single buffered']
    #allocation4 [shape = 's32[1]{0}', space=sflag, size = 0x4, scoped, tag = 'scoped memory for tpu_custom_call.1']
    #allocation5 [shape = 's32[1]{0}', space=sflag, size = 0x4, scoped, tag = 'scoped memory for tpu_custom_call.1']
    #allocation6 [shape = 'u8[8192]{0}', space=vmem, size = 0x2000, scoped, tag = 'input window, operand 1, single buffered']
    #allocation7 [shape = 's32[1]{0}', space=sflag, size = 0x4, scoped, tag = 'scoped memory for tpu_custom_call.1']
    #allocation8 [shape = 'u8[512]{0}', space=smem, size = 0x200, scoped, tag = 'output window, operand 0, single buffered']
    %7 = vsyncpa [#allocation4], 0
    %8 = vsyncpa [#allocation7], 0
    %9 = vsyncpa [#allocation5], 0
    // Predicated region
    $region2: #{tpu_custom_call.1} parent=1 // pred_check
      _
    $region3: #{tpu_custom_call.1} parent=1 // pred_check_branch
      %11 = sbr.rel (0) target = $region5
    $region4: #{tpu_custom_call.1} parent=1 // pred_region
      %s12 = sadd.s32 0, 0
      %s13 = smul.u32 2, %s12
      %s15 = ssub.s32 256, 256
      %16 = vsyncadd [#allocation4], %s15
      %s17 = smul.addr %s13, 128
      %s18 = scalar_lea.hbm %s0, %s17
      %s19 = sshll.u32 [#allocation3], 4
      %s20 = int_to_ptr.vmem [resolvable:$true] %s19
      %25 = dma.hbm_to_vmem [thread:$0]  %s18, 256, %s20, [#allocation4], 128, 128, 8
    $region5: #{tpu_custom_call.1} parent=1 // pred_fallthru
      _
    // Predicated region
    $region6: #{tpu_custom_call.1} parent=1 // pred_check
      _
    $region7: #{tpu_custom_call.1} parent=1 // pred_check_branch
      %27 = sbr.rel (0) target = $region9
    $region8: #{tpu_custom_call.1} parent=1 // pred_region
      %s28 = sadd.s32 0, 0
      %s29 = smul.u32 2, %s28
      %s31 = ssub.s32 256, 256
      %32 = vsyncadd [#allocation7], %s31
      %s33 = smul.addr %s29, 128
      %s34 = scalar_lea.hbm %s1, %s33
      %s35 = sshll.u32 [#allocation6], 4
      %s36 = int_to_ptr.vmem [resolvable:$true] %s35
      %41 = dma.hbm_to_vmem [thread:$0]  %s34, 256, %s36, [#allocation7], 128, 128, 8
    $region9: #{tpu_custom_call.1} parent=1 // pred_fallthru
      _
    // Predicated region
    $region10: #{tpu_custom_call.1} parent=1 // pred_check
      _
    $region11: #{tpu_custom_call.1} parent=1 // pred_check_branch
      %43 = sbr.rel (0) target = $region13
    $region12: #{tpu_custom_call.1} parent=1 // pred_region
      %44 = dma.done [#allocation4], 256
    $region13: #{tpu_custom_call.1} parent=1 // pred_fallthru
      _
    // Predicated region
    $region14: #{tpu_custom_call.1} parent=1 // pred_check
      _
    $region15: #{tpu_custom_call.1} parent=1 // pred_check_branch
      %46 = sbr.rel (0) target = $region17
    $region16: #{tpu_custom_call.1} parent=1 // pred_region
      %47 = dma.done [#allocation7], 256
    $region17: #{tpu_custom_call.1} parent=1 // pred_fallthru
      _
    %s48 = sadd.s32 0, 0
    %s49 = smul.u32 2, %s48
    %s50 = sadd.s32 0, 0
    %s51 = smul.u32 2, %s50
    %p52 = scmp.eq.s32.totalorder 0, 0
    // Predicated region
    $region18: #{tpu_custom_call.1} parent=1 // pred_check
      %p53 = pneg %p52
    $region19: #{tpu_custom_call.1} parent=1 // pred_check_branch
      %55 = sbr.rel (%p53) target = $region21
    $region20: #{tpu_custom_call.1} parent=1 // pred_region
      %56 = vst [vmem:[#allocation2] sm:$0xff] 0.0
    $region21: #{tpu_custom_call.1} parent=1 // pred_fallthru
      _
    %v57 = vld [vmem:[#allocation3] sm:$0xff]
    %v58 = vld [vmem:[#allocation3 + $0x8] sm:$0xff]
    %v59 = vld [vmem:[#allocation6] sm:$0xff]
    %v60 = vld [vmem:[#allocation6 + $0x8] sm:$0xff]
    %v61 = vlog2.pop %v57
    %v62 = vmul.f32 %v61, 0.6931472
    %v63 = vlog2.pop %v58
    %v64 = vmul.f32 %v63, 0.6931472
    %v65 = vmul.f32 %v59, %v62
    %v66 = vmul.f32 %v60, %v64
    %v67 = vld [vmem:[#allocation2] sm:$0xff]
    %v68 = vadd.f32 %v65, %v66
    %v69 = vadd.f32 %v67, %v68
    %70 = vst [vmem:[#allocation2] sm:$0xff] %v69
    // Predicated region
    $region22: #{tpu_custom_call.1} parent=1 // pred_check
      %p71 = pneg %p52
    $region23: #{tpu_custom_call.1} parent=1 // pred_check_branch
      %73 = sbr.rel (%p71) target = $region25
    $region24: #{tpu_custom_call.1} parent=1 // pred_region
      %v74 = vld [vmem:[#allocation2] sm:$0xff]
      %75 = vadd.xlane.f32.xlu0 %v74
      %v76 = vpop.xlane.xlu0 %75
      %v77 = vrot.slane %v76, 4
      %v78 = vadd.f32 %v76, %v77
      %v79 = vrot.slane %v78, 2
      %v80 = vadd.f32 %v78, %v79
      %v81 = vrot.slane %v80, 1
      %v82 = vadd.f32 %v80, %v81
      %s83 = vtos %v82
      %s84 = ssub.f32 0.0, %s83
      %s85 = scalar_lea.smem [#allocation8], 0
      %86 = sst [smem:[%s85]] %s84
    $region25: #{tpu_custom_call.1} parent=1 // pred_fallthru
      _
    // Predicated region
    $region26: #{tpu_custom_call.1} parent=1 // pred_check
      _
    $region27: #{tpu_custom_call.1} parent=1 // pred_check_branch
      %88 = sbr.rel (0) target = $region29
    $region28: #{tpu_custom_call.1} parent=1 // pred_region
      %s90 = ssub.s32 16, 16
      %91 = vsyncadd [#allocation5], %s90
      %94 = dma.smem_to_hbm [#allocation8], 16, %s2, [#allocation5]
    $region29: #{tpu_custom_call.1} parent=1 // pred_fallthru
      _
    // Predicated region
    $region30: #{tpu_custom_call.1} parent=1 // pred_check
      _
    $region31: #{tpu_custom_call.1} parent=1 // pred_check_branch
      %96 = sbr.rel (0) target = $region33
    $region32: #{tpu_custom_call.1} parent=1 // pred_region
      %97 = dma.done [#allocation5], 16
    $region33: #{tpu_custom_call.1} parent=1 // pred_fallthru
      _
    %98 = sfence
    %99 = vsyncpa [#allocation4], 1
    %100 = vsyncpa [#allocation7], 1
    %101 = vsyncpa [#allocation5], 1

</llo_original>
